<compile_context>
chip_gen: v7x
topology: tpu7x:2x2x1
jax: 0.10.0
libtpu: 0.0.40
codegen_flags: <defaults>
</compile_context>

<pallas_src>
import functools

import jax
import jax.numpy as jnp
from jax.experimental import pallas as pl
from jax.experimental.pallas import tpu as pltpu

SMOOTH = 1e-05
_LANES = 128


def _dice_partial_kernel(pred_ref, true_ref, out_ref, *, num_classes):
    # pred_ref: (C, SBT, 128) f32 logits tile (channel-major, dense 2-D slabs)
    # true_ref: (SBT, 128) int8 label tile
    # out_ref : (3*C, 128) f32 lane-partials [intersect_c, z_sum_c, y_sum_c]
    C = num_classes

    logits = [pred_ref[c] for c in range(C)]          # C x (SBT, 128)

    # softmax over the (unrolled) channel axis
    m = logits[0]
    for c in range(1, C):
        m = jnp.maximum(m, logits[c])
    exps = [jnp.exp(x - m) for x in logits]
    denom = exps[0]
    for c in range(1, C):
        denom = denom + exps[c]
    inv = 1.0 / denom                                 # one divide per pixel

    labels = true_ref[...].astype(jnp.int32)          # widen int8 -> int32

    rows = []
    for c in range(C):
        p = exps[c] * inv                             # softmax prob for class c
        oh = (labels == c).astype(jnp.float32)        # on-the-fly one-hot
        # sublane-direction partial sums only (lane reduction deferred to wrapper)
        rows.append(jnp.sum(p * oh, axis=0, keepdims=True))   # intersect (1,128)
        rows.append(jnp.sum(p * p, axis=0, keepdims=True))    # z_sum     (1,128)
        rows.append(jnp.sum(oh, axis=0, keepdims=True))       # y_sum     (1,128)

    out_ref[...] = jnp.concatenate(rows, axis=0)      # (3*C, 128)


def _pick_tile_rows(sb, max_rows):
    """Largest tile height (in 128-lane rows) that divides sb."""
    if sb <= max_rows:
        return sb
    start = max_rows - (max_rows % 8)
    for cand in range(start, 0, -8):                  # keep 2nd-minor a multiple of 8
        if sb % cand == 0:
            return cand
    return sb                                         # no aligned divisor: one big tile


def dice_loss_pallas(y_pred, y_true, num_classes=3, weight=None, max_tile_rows=512):
    """Forward of DiceLoss (crossentropy=False, give_penalty=False)."""
    # TODO(synk): crossentropy / give_penalty branches of the module are not
    # exercised by the default config and are not implemented here.
    N, C, H, W = y_pred.shape
    assert C == num_classes, (C, num_classes)
    if weight is None:
        weight = [1.0] * num_classes

    HW = H * W
    assert HW % _LANES == 0, "H*W must be a multiple of 128"
    # TODO(synk): ragged spatial extents (HW % 128 != 0) would need a masked tail tile.
    SB = HW // _LANES
    SBT = _pick_tile_rows(SB, max_tile_rows)
    S_chunks = SB // SBT

    pred = y_pred.reshape(N, C, SB, _LANES).astype(jnp.float32)
    true = y_true.reshape(N, SB, _LANES).astype(jnp.int8)   # 1 B/pixel HBM traffic

    sq = pl.Squeezed() if hasattr(pl, "Squeezed") else None

    kernel = functools.partial(_dice_partial_kernel, num_classes=C)

    partials = pl.pallas_call(
        kernel,
        out_shape=jax.ShapeDtypeStruct((N, S_chunks, 3 * C, _LANES), jnp.float32),
        grid=(N, S_chunks),
        in_specs=[
            pl.BlockSpec((sq, C, SBT, _LANES), lambda b, s: (b, 0, s, 0)),
            pl.BlockSpec((sq, SBT, _LANES), lambda b, s: (b, s, 0)),
        ],
        out_specs=pl.BlockSpec((sq, sq, 3 * C, _LANES), lambda b, s: (b, s, 0, 0)),
        compiler_params=pltpu.CompilerParams(
            dimension_semantics=("parallel", "parallel")
        ),
    )(pred, true)

    # Tiny epilogue in plain JAX: final lane reduce + dice formula + weights.
    tot = jnp.sum(partials, axis=(0, 1, 3)).reshape(C, 3)
    intersect = tot[:, 0]
    z_sum = tot[:, 1]
    y_sum = tot[:, 2]
    dice = 1.0 - (2.0 * intersect + SMOOTH) / (z_sum + y_sum + SMOOTH)
    w = jnp.asarray([float(x) for x in weight], dtype=jnp.float32)
    return jnp.sum(dice * w) / jnp.float32(num_classes)


def dice_loss_ref(y_pred, y_true, num_classes=3, weight=None):
    """Pure-JAX reference mirroring the PyTorch forward (default config)."""
    if weight is None:
        weight = [1.0] * num_classes
    probs = jax.nn.softmax(y_pred.astype(jnp.float32), axis=1)
    onehot = jax.nn.one_hot(y_true, num_classes, axis=1, dtype=jnp.float32)
    loss = 0.0
    for i in range(num_classes):
        s = probs[:, i]
        t = onehot[:, i]
        inter = jnp.sum(s * t)
        ys = jnp.sum(t * t)
        zs = jnp.sum(s * s)
        dice = 1.0 - (2.0 * inter + SMOOTH) / (zs + ys + SMOOTH)
        loss = loss + dice * weight[i]
    return loss / num_classes


if __name__ == "__main__":
    key = jax.random.PRNGKey(0)
    k_pred, k_true = jax.random.split(key)

    N, C, H, W = 2, 3, 16, 16
    y_pred = jax.random.normal(k_pred, (N, C, H, W), dtype=jnp.float32)
    y_true = jax.random.randint(k_true, (N, H, W), 0, C, dtype=jnp.int32)

    loss = dice_loss_pallas(y_pred, y_true, num_classes=C)
    loss = jax.block_until_ready(loss)

    ref = dice_loss_ref(y_pred, y_true, num_classes=C)
    assert jnp.allclose(loss, ref, atol=1e-5, rtol=1e-5), (loss, ref)

    print("KERNEL_OK")
</pallas_src>

<mosaic_0001>
module attributes {stable_mosaic.version = 11 : i64} {
  func.func @_dice_partial_kernel(%arg0: i32, %arg1: i32, %arg2: memref<1x3x2x128xf32, #tpu.memory_space<vmem>>, %arg3: memref<1x2x128xi8, #tpu.memory_space<vmem>>, %arg4: memref<1x1x9x128xf32, #tpu.memory_space<vmem>>) attributes {dimension_semantics = [#tpu.dimension_semantics<parallel>, #tpu.dimension_semantics<parallel>], iteration_bounds = array<i64: 2, 1>, scalar_prefetch = 0 : i64, scratch_operands = 0 : i64, tpu.core_type = #tpu.core_type<tc>, window_params = [{transform_indices = @transform_0, window_bounds = array<i64: 1, 3, 2, 128>}, {transform_indices = @transform_1, window_bounds = array<i64: 1, 2, 128>}, {transform_indices = @transform_2, window_bounds = array<i64: 1, 1, 9, 128>}]} {
    %c0 = arith.constant 0 : index
    %c0_0 = arith.constant 0 : index
    %c0_1 = arith.constant 0 : index
    %c0_2 = arith.constant 0 : index
    %0 = vector.load %arg2[%c0, %c0_0, %c0_1, %c0_2] : memref<1x3x2x128xf32, #tpu.memory_space<vmem>>, vector<1x1x2x128xf32>
    %1 = vector.shape_cast %0 : vector<1x1x2x128xf32> to vector<2x128xf32>
    %c0_3 = arith.constant 0 : index
    %c1 = arith.constant 1 : index
    %c0_4 = arith.constant 0 : index
    %c0_5 = arith.constant 0 : index
    %2 = vector.load %arg2[%c0_3, %c1, %c0_4, %c0_5] : memref<1x3x2x128xf32, #tpu.memory_space<vmem>>, vector<1x1x2x128xf32>
    %3 = vector.shape_cast %2 : vector<1x1x2x128xf32> to vector<2x128xf32>
    %c0_6 = arith.constant 0 : index
    %c2 = arith.constant 2 : index
    %c0_7 = arith.constant 0 : index
    %c0_8 = arith.constant 0 : index
    %4 = vector.load %arg2[%c0_6, %c2, %c0_7, %c0_8] : memref<1x3x2x128xf32, #tpu.memory_space<vmem>>, vector<1x1x2x128xf32>
    %5 = vector.shape_cast %4 : vector<1x1x2x128xf32> to vector<2x128xf32>
    %6 = arith.maximumf %1, %3 : vector<2x128xf32>
    %7 = arith.maximumf %6, %5 : vector<2x128xf32>
    %8 = arith.subf %1, %7 : vector<2x128xf32>
    %9 = math.exp %8 : vector<2x128xf32>
    %10 = arith.subf %3, %7 : vector<2x128xf32>
    %11 = math.exp %10 : vector<2x128xf32>
    %12 = arith.subf %5, %7 : vector<2x128xf32>
    %13 = math.exp %12 : vector<2x128xf32>
    %14 = arith.addf %9, %11 : vector<2x128xf32>
    %15 = arith.addf %14, %13 : vector<2x128xf32>
    %cst = arith.constant 1.000000e+00 : f32
    %16 = vector.broadcast %cst : f32 to vector<2x128xf32>
    %17 = arith.divf %16, %15 : vector<2x128xf32>
    %c0_9 = arith.constant 0 : index
    %c0_10 = arith.constant 0 : index
    %c0_11 = arith.constant 0 : index
    %18 = vector.load %arg3[%c0_9, %c0_10, %c0_11] : memref<1x2x128xi8, #tpu.memory_space<vmem>>, vector<1x2x128xi8>
    %19 = vector.shape_cast %18 : vector<1x2x128xi8> to vector<2x128xi8>
    %20 = arith.extsi %19 : vector<2x128xi8> to vector<2x128xi32>
    %21 = arith.mulf %9, %17 : vector<2x128xf32>
    %c0_i32 = arith.constant 0 : i32
    %22 = vector.broadcast %c0_i32 : i32 to vector<2x128xi32>
    %23 = arith.cmpi eq, %20, %22 : vector<2x128xi32>
    %24 = arith.extui %23 : vector<2x128xi1> to vector<2x128xi32>
    %25 = arith.sitofp %24 : vector<2x128xi32> to vector<2x128xf32>
    %26 = arith.mulf %21, %25 : vector<2x128xf32>
    %cst_12 = arith.constant dense<0.000000e+00> : vector<128xf32>
    %27 = vector.multi_reduction <add>, %26, %cst_12 [0] : vector<2x128xf32> to vector<128xf32>
    %28 = vector.shape_cast %27 : vector<128xf32> to vector<1x128xf32>
    %29 = arith.mulf %21, %21 : vector<2x128xf32>
    %cst_13 = arith.constant dense<0.000000e+00> : vector<128xf32>
    %30 = vector.multi_reduction <add>, %29, %cst_13 [0] : vector<2x128xf32> to vector<128xf32>
    %31 = vector.shape_cast %30 : vector<128xf32> to vector<1x128xf32>
    %cst_14 = arith.constant dense<0.000000e+00> : vector<128xf32>
    %32 = vector.multi_reduction <add>, %25, %cst_14 [0] : vector<2x128xf32> to vector<128xf32>
    %33 = vector.shape_cast %32 : vector<128xf32> to vector<1x128xf32>
    %34 = arith.mulf %11, %17 : vector<2x128xf32>
    %c1_i32 = arith.constant 1 : i32
    %35 = vector.broadcast %c1_i32 : i32 to vector<2x128xi32>
    %36 = arith.cmpi eq, %20, %35 : vector<2x128xi32>
    %37 = arith.extui %36 : vector<2x128xi1> to vector<2x128xi32>
    %38 = arith.sitofp %37 : vector<2x128xi32> to vector<2x128xf32>
    %39 = arith.mulf %34, %38 : vector<2x128xf32>
    %cst_15 = arith.constant dense<0.000000e+00> : vector<128xf32>
    %40 = vector.multi_reduction <add>, %39, %cst_15 [0] : vector<2x128xf32> to vector<128xf32>
    %41 = vector.shape_cast %40 : vector<128xf32> to vector<1x128xf32>
    %42 = arith.mulf %34, %34 : vector<2x128xf32>
    %cst_16 = arith.constant dense<0.000000e+00> : vector<128xf32>
    %43 = vector.multi_reduction <add>, %42, %cst_16 [0] : vector<2x128xf32> to vector<128xf32>
    %44 = vector.shape_cast %43 : vector<128xf32> to vector<1x128xf32>
    %cst_17 = arith.constant dense<0.000000e+00> : vector<128xf32>
    %45 = vector.multi_reduction <add>, %38, %cst_17 [0] : vector<2x128xf32> to vector<128xf32>
    %46 = vector.shape_cast %45 : vector<128xf32> to vector<1x128xf32>
    %47 = arith.mulf %13, %17 : vector<2x128xf32>
    %c2_i32 = arith.constant 2 : i32
    %48 = vector.broadcast %c2_i32 : i32 to vector<2x128xi32>
    %49 = arith.cmpi eq, %20, %48 : vector<2x128xi32>
    %50 = arith.extui %49 : vector<2x128xi1> to vector<2x128xi32>
    %51 = arith.sitofp %50 : vector<2x128xi32> to vector<2x128xf32>
    %52 = arith.mulf %47, %51 : vector<2x128xf32>
    %cst_18 = arith.constant dense<0.000000e+00> : vector<128xf32>
    %53 = vector.multi_reduction <add>, %52, %cst_18 [0] : vector<2x128xf32> to vector<128xf32>
    %54 = vector.shape_cast %53 : vector<128xf32> to vector<1x128xf32>
    %55 = arith.mulf %47, %47 : vector<2x128xf32>
    %cst_19 = arith.constant dense<0.000000e+00> : vector<128xf32>
    %56 = vector.multi_reduction <add>, %55, %cst_19 [0] : vector<2x128xf32> to vector<128xf32>
    %57 = vector.shape_cast %56 : vector<128xf32> to vector<1x128xf32>
    %cst_20 = arith.constant dense<0.000000e+00> : vector<128xf32>
    %58 = vector.multi_reduction <add>, %51, %cst_20 [0] : vector<2x128xf32> to vector<128xf32>
    %59 = vector.shape_cast %58 : vector<128xf32> to vector<1x128xf32>
    %60 = tpu.concatenate %28, %31, %33, %41, %44, %46, %54, %57, %59 in 0 : vector<1x128xf32>, vector<1x128xf32>, vector<1x128xf32>, vector<1x128xf32>, vector<1x128xf32>, vector<1x128xf32>, vector<1x128xf32>, vector<1x128xf32>, vector<1x128xf32> -> vector<9x128xf32>
    %c0_21 = arith.constant 0 : index
    %c0_22 = arith.constant 0 : index
    %c0_23 = arith.constant 0 : index
    %c0_24 = arith.constant 0 : index
    %61 = vector.load %arg4[%c0_21, %c0_22, %c0_23, %c0_24] : memref<1x1x9x128xf32, #tpu.memory_space<vmem>>, vector<1x1x9x128xf32>
    %62 = vector.shape_cast %61 : vector<1x1x9x128xf32> to vector<9x128xf32>
    %63 = vector.shape_cast %60 : vector<9x128xf32> to vector<1x1x9x128xf32>
    tpu.vector_store %arg4[%c0_21, %c0_22, %c0_23, %c0_24], %63 {strides = array<i32>} : memref<1x1x9x128xf32, #tpu.memory_space<vmem>>, vector<1x1x9x128xf32>,
    return
  }
  func.func @transform_0(%arg0: i32, %arg1: i32) -> (i32, i32, i32, i32) {
    %c0_i32 = arith.constant 0 : i32
    %c0_i32_0 = arith.constant 0 : i32
    %c0_i32_1 = arith.constant 0 : i32
    return %arg0, %c0_i32, %arg1, %c0_i32_0 : i32, i32, i32, i32
  }
  func.func @transform_1(%arg0: i32, %arg1: i32) -> (i32, i32, i32) {
    %c0_i32 = arith.constant 0 : i32
    %c0_i32_0 = arith.constant 0 : i32
    return %arg0, %arg1, %c0_i32 : i32, i32, i32
  }
  func.func @transform_2(%arg0: i32, %arg1: i32) -> (i32, i32, i32, i32) {
    %c0_i32 = arith.constant 0 : i32
    %c0_i32_0 = arith.constant 0 : i32
    %c0_i32_1 = arith.constant 0 : i32
    return %arg0, %arg1, %c0_i32, %c0_i32_0 : i32, i32, i32, i32
  }
}

</mosaic_0001>

<llo_original>
// kernel: tpu_custom_call.1
$region0: #{tpu_custom_call.1}
  #allocation0 [shape = 'u32[]', space=smem, size = 0x4, offset = 0x4, fixed_abs, tag = 'smem constant byte address 0x4 - core index']
  #allocation1 [shape = 'u32[144,128]{1,0:T(1,128)}', space=vmem, size = 0x12000, scoped, tag = 'internal scratch']
  %s0 = inlined_call_operand.hbm [shape: f32[2,3,2,128], index: 0, kind: input, shape index: {}]
  %s1 = inlined_call_operand.vmem [shape: s8[2,2,128], index: 1, kind: input, shape index: {}]
  %s2 = inlined_call_operand.vmem [shape: f32[2,1,9,128], index: 2, kind: output, shape index: {}]
  %s3 = sld [smem:[#allocation0]]
  $region45: #{tpu_custom_call.1} parent=0
    _
  %s5 = ssub.s32 1, %s3
  %s6 = scalar_select 0, %s5, %s3
  $region1: #{tpu_custom_call.1} parent=0
    #allocation2 [shape = 'u8[6144]{0}', space=vmem, size = 0x1800, scoped, tag = 'input window, operand 0']
    #allocation3 [shape = 's32[2]{0}', space=sflag, size = 0x8, scoped, tag = 'scoped memory for tpu_custom_call.1']
    %7 = vsyncpa [#allocation3], 0
    %s8 = scalar_lea.sflag [#allocation3], 1
    %9 = vsyncpa %s8, 0
    loop: start=0, step=1, limit=4
    $region2: #{tpu_custom_call.1} parent=1 // loop_pre_header
      _
    $region3: #{tpu_custom_call.1} parent=1 // loop_header
      %s11 = sphi 0, %s15
      %p12 = scmp.ge.s32.totalorder %s11, 4
      %s18 = sphi 0, %s30
      %s19 = sphi 0, %s26
      %s20 = sphi 0, %s18
      %s21 = sphi 0, %s19
      %s22 = sphi 0, %s20
      %s23 = sphi 0, %s21
      %s35 = sphi 0, %s37
      %s38 = sphi 0, %s35
      %s39 = sphi 0, %s38
      %s55 = sphi 0, %s39
      %s63 = sphi 0, %s65
      %s66 = sphi 0, %s63
      %s67 = sphi 0, %s66
      %s83 = sphi 0, %s67
      %s91 = sphi 0, %s93
      %s94 = sphi 0, %s91
      %s95 = sphi 0, %s94
      %s111 = sphi 0, %s95
    $region4: #{tpu_custom_call.1} parent=1 // loop_header_branch
      %14 = sbr.rel (%p12) target = $region8
    $region5: #{tpu_custom_call.1} parent=1 // loop_body
      %s16 = ssub.s32 %s11, 1
      %s17 = ssub.s32 %s11, 2
      %s24 = sadd.s32 1, %s19
      %p25 = scmp.ge.s32.totalorder %s24, 1
      %s26 = scalar_select %p25, 0, %s24
      %s27 = sadd.s32 1, %s18
      %s28 = scalar_select %p25, %s27, %s18
      %p29 = scmp.ge.s32.totalorder %s28, 2
      %s30 = scalar_select %p29, 0, %s28
      %s31 = ssub.s32 %s18, %s30
      %s32 = ssub.s32 %s19, %s26
      %s33 = sor.u32 %s31, %s32
      %p34 = scmp.eq.s32.totalorder %s33, 0
      %s36 = sadd.s32 %s35, 1
      %s37 = scalar_select %p34, %s35, %s36
      %p40 = pneg %p34
      %p41 = scmp.eq.s32.totalorder %s11, 1
      %p42 = por %p40, %p41
      %p43 = scmp.ne.s32.totalorder %s35, %s38
      %p44 = scmp.eq.s32.totalorder %s11, 0
      %p45 = por %p43, %p44
      %p46 = scmp.ne.s32.totalorder %s35, %s38
      %p47 = scmp.eq.s32.totalorder %s16, 1
      %p48 = por %p46, %p47
      %p49 = scmp.ne.s32.totalorder %s38, %s39
      %p50 = scmp.eq.s32.totalorder %s16, 0
      %p51 = por %p49, %p50
      %p52 = scmp.ne.s32.totalorder %s38, %s39
      %p53 = scmp.eq.s32.totalorder %s17, 1
      %p54 = por %p52, %p53
      %p56 = scmp.ne.s32.totalorder %s39, %s55
      %p57 = scmp.eq.s32.totalorder %s17, 0
      %p58 = por %p56, %p57
      %s59 = ssub.s32 %s18, %s30
      %s60 = ssub.s32 %s19, %s26
      %s61 = sor.u32 %s59, %s60
      %p62 = scmp.eq.s32.totalorder %s61, 0
      %s64 = sadd.s32 %s63, 1
      %s65 = scalar_select %p62, %s63, %s64
      %p68 = pneg %p62
      %p69 = scmp.eq.s32.totalorder %s11, 1
      %p70 = por %p68, %p69
      %p71 = scmp.ne.s32.totalorder %s63, %s66
      %p72 = scmp.eq.s32.totalorder %s11, 0
      %p73 = por %p71, %p72
      %p74 = scmp.ne.s32.totalorder %s63, %s66
      %p75 = scmp.eq.s32.totalorder %s16, 1
      %p76 = por %p74, %p75
      %p77 = scmp.ne.s32.totalorder %s66, %s67
      %p78 = scmp.eq.s32.totalorder %s16, 0
      %p79 = por %p77, %p78
      %p80 = scmp.ne.s32.totalorder %s66, %s67
      %p81 = scmp.eq.s32.totalorder %s17, 1
      %p82 = por %p80, %p81
      %p84 = scmp.ne.s32.totalorder %s67, %s83
      %p85 = scmp.eq.s32.totalorder %s17, 0
      %p86 = por %p84, %p85
      %s87 = ssub.s32 %s18, %s30
      %s88 = ssub.s32 %s19, %s26
      %s89 = sor.u32 %s87, %s88
      %p90 = scmp.eq.s32.totalorder %s89, 0
      %s92 = sadd.s32 %s91, 1
      %s93 = scalar_select %p90, %s91, %s92
      %p96 = pneg %p90
      %p97 = scmp.eq.s32.totalorder %s11, 1
      %p98 = por %p96, %p97
      %p99 = scmp.ne.s32.totalorder %s91, %s94
      %p100 = scmp.eq.s32.totalorder %s11, 0
      %p101 = por %p99, %p100
      %p102 = scmp.ne.s32.totalorder %s91, %s94
      %p103 = scmp.eq.s32.totalorder %s16, 1
      %p104 = por %p102, %p103
      %p105 = scmp.ne.s32.totalorder %s94, %s95
      %p106 = scmp.eq.s32.totalorder %s16, 0
      %p107 = por %p105, %p106
      %p108 = scmp.ne.s32.totalorder %s94, %s95
      %p109 = scmp.eq.s32.totalorder %s17, 1
      %p110 = por %p108, %p109
      %p112 = scmp.ne.s32.totalorder %s95, %s111
      %p113 = scmp.eq.s32.totalorder %s17, 0
      %p114 = por %p112, %p113
      %p115 = scmp.le.s32.totalorder 1, %s11
      %p116 = scmp.lt.s32.totalorder %s11, 3
      %p117 = pnand %p115, %p116
      %p118 = pneg %p117
      // Predicated region
      $region9: #{tpu_custom_call.1} parent=5 // pred_check
        _
      $region10: #{tpu_custom_call.1} parent=5 // pred_check_branch
        %120 = sbr.rel (%p117) target = $region12
      $region11: #{tpu_custom_call.1} parent=5 // pred_region
        %s121 = ssub.s32 %s11, 1
      $region12: #{tpu_custom_call.1} parent=5 // pred_fallthru
        _
      %p122 = scmp.lt.s32.totalorder %s11, 2
      // Predicated region
      $region13: #{tpu_custom_call.1} parent=5 // pred_check
        %p123 = pneg %p122
      $region14: #{tpu_custom_call.1} parent=5 // pred_check_branch
        %125 = sbr.rel (%p123) target = $region16
      $region15: #{tpu_custom_call.1} parent=5 // pred_region
        // Predicated region
        $region17: #{tpu_custom_call.1} parent=15 // pred_check
          %p126 = pneg %p45
        $region18: #{tpu_custom_call.1} parent=15 // pred_check_branch
          %128 = sbr.rel (%p126) target = $region20
        $region19: #{tpu_custom_call.1} parent=15 // pred_region
          %s129 = sand.u32 %s35, 1
          %s130 = scalar_lea.sflag [#allocation3], %s129
          %s131 = sand.u32 %s35, 1
          %s132 = smul.addr %s131, 6
          %s133 = scalar_lea.vmem [#allocation2], %s132
          %s135 = ssub.s32 96, 96
          %136 = vsyncadd %s130, %s135
          %s137 = smul.addr %s18, 3
          %s138 = sadd.s32 %s19, %s137
          %s139 = smul.addr %s138, 32
          %s140 = scalar_lea.hbm %s0, %s139
          %s141 = sshll.u32 %s133, 4
          %s142 = int_to_ptr.vmem [resolvable:$true] %s141
          %147 = dma.hbm_to_vmem [thread:$0]  %s140, 96, %s142, %s130, 32, 32, 2
        $region20: #{tpu_custom_call.1} parent=15 // pred_fallthru
          _
        // Predicated region
        $region21: #{tpu_custom_call.1} parent=15 // pred_check
          %p148 = pneg %p73
        $region22: #{tpu_custom_call.1} parent=15 // pred_check_branch
          %150 = sbr.rel (%p148) target = $region24
        $region23: #{tpu_custom_call.1} parent=15 // pred_region
          %p151 = scmp.lt.s32.totalorder %s18, 1
          %s152 = scalar_select %p151, %s18, 1
          %p153 = scmp.lt.s32.totalorder %s19, 0
          %s154 = scalar_select %p153, %s19, 0
          %s155 = sadd.s32 %s154, %s152
          %s156 = scalar_lea.vmem %s1, %s155
        $region24: #{tpu_custom_call.1} parent=15 // pred_fallthru
          _
      $region16: #{tpu_custom_call.1} parent=5 // pred_fallthru
        _
      %p157 = scmp.le.s32.totalorder 1, %s11
      %p158 = scmp.lt.s32.totalorder %s11, 3
      %p159 = pnand %p157, %p158
      %p160 = pneg %p159
      // Predicated region
      $region25: #{tpu_custom_call.1} parent=5 // pred_check
        _
      $region26: #{tpu_custom_call.1} parent=5 // pred_check_branch
        %162 = sbr.rel (%p159) target = $region28
      $region27: #{tpu_custom_call.1} parent=5 // pred_region
        %s163 = ssub.s32 %s11, 1
        %s164 = sand.u32 %s38, 1
        %s165 = scalar_lea.sflag [#allocation3], %s164
        %s166 = sand.u32 %s38, 1
        %s167 = smul.addr %s166, 6
        %s168 = scalar_lea.vmem [#allocation2], %s167
        // Predicated region
        $region29: #{tpu_custom_call.1} parent=27 // pred_check
          %p169 = pneg %p51
        $region30: #{tpu_custom_call.1} parent=27 // pred_check_branch
          %171 = sbr.rel (%p169) target = $region32
        $region31: #{tpu_custom_call.1} parent=27 // pred_region
          %172 = dma.done %s165, 96
        $region32: #{tpu_custom_call.1} parent=27 // pred_fallthru
          _
        %s173 = sand.u32 %s38, 1
        %s174 = scalar_lea.sflag [#allocation3], %s173
        %s175 = sand.u32 %s38, 1
        %s176 = smul.addr %s175, 6
        %s177 = scalar_lea.vmem [#allocation2], %s176
        %p178 = pneg %p51
        %p179 = pneg %p48
        %p180 = scmp.lt.s32.totalorder %s20, 1
        %s181 = scalar_select %p180, %s20, 1
        %p182 = scmp.lt.s32.totalorder %s21, 0
        %s183 = scalar_select %p182, %s21, 0
        %s184 = sadd.s32 %s183, %s181
        %s185 = scalar_lea.vmem %s1, %s184
        %p186 = pneg %p79
        %p187 = pneg %p76
        %p188 = pneg %p107
        %p189 = pneg %p104
        %p190 = scmp.lt.s32.totalorder %s20, 1
        %s191 = scalar_select %p190, %s20, 1
        %p192 = scmp.lt.s32.totalorder %s21, 0
        %s193 = scalar_select %p192, %s21, 0
        %s194 = smul.addr %s193, 2
        %s195 = smul.addr %s191, 2
        %s196 = sadd.s32 %s194, %s195
        %s197 = smul.addr %s196, 8
        %s198 = scalar_lea.vmem %s2, %s197
        %p199 = scmp.lt.s32.totalorder %s20, 1
        %s200 = scalar_select %p199, %s20, 1
        %p201 = scmp.lt.s32.totalorder %s21, 0
        %s202 = scalar_select %p201, %s21, 0
        %s203 = sadd.s32 %s202, %s200
        %s204 = scalar_lea.vmem %s1, %s203
        %p205 = scmp.lt.s32.totalorder %s20, 1
        %s206 = scalar_select %p205, %s20, 1
        %p207 = scmp.lt.s32.totalorder %s21, 0
        %s208 = scalar_select %p207, %s21, 0
        %s209 = smul.addr %s208, 2
        %s210 = smul.addr %s206, 2
        %s211 = sadd.s32 %s209, %s210
        %s212 = smul.addr %s211, 8
        %s213 = scalar_lea.vmem %s2, %s212
        %v214 = vld [vmem:[%s168] sm:$0x3]
        %s215 = scalar_lea.vmem %s168, 2 [#allocation2]
        %v216 = vld [vmem:[%s215] sm:$0x3]
        %s217 = scalar_lea.vmem %s168, 4 [#allocation2]
        %v218 = vld [vmem:[%s217] sm:$0x3]
        %v219 = vmax.f32 %v214, %v216
        %v220 = vmax.f32 %v219, %v218
        %v221 = vsub.f32 %v214, %v220
        %v222 = vmul.f32 %v221, 1.442695
        %v223 = vpow.pop %v222
        %v224 = vsub.f32 %v216, %v220
        %v225 = vmul.f32 %v224, 1.442695
        %v226 = vpow.pop %v225
        %v227 = vsub.f32 %v218, %v220
        %v228 = vmul.f32 %v227, 1.442695
        %v229 = vpow.pop %v228
        %v230 = vadd.f32 %v223, %v226
        %v231 = vadd.f32 %v230, %v229
        %v232 = vrcp.pop %v231
        %v233 = vmul.f32 1.0, %v232
        %v234 = vld [vmem:[%s204] sm:$0x1]
        %v235 = vunpack.c.0.s8 %v234
        %v236 = vmul.f32 %v223, %v233
        %vm237 = vcmp.eq.s32.totalorder %v235, 0
        %v238 = vsel %vm237, 1, 0
        %v239 = vcvt.s32.f32 %v238
        %v240 = vmul.f32 %v236, %v239
        %vm241 = vcmask 1041408
        %v242 = vsel %vm241, %v240, 0.0
        %v243 = vrot.slane %v242, 4
        %v244 = vadd.f32 %v242, %v243
        %v245 = vrot.slane %v244, 2
        %v246 = vadd.f32 %v244, %v245
        %v247 = vrot.slane %v246, 1
        %v248 = vadd.f32 %v246, %v247
        %v249 = vmul.f32 %v236, %v236
        %v250 = vsel %vm241, %v249, 0.0
        %v251 = vrot.slane %v250, 4
        %v252 = vadd.f32 %v250, %v251
        %v253 = vrot.slane %v252, 2
        %v254 = vadd.f32 %v252, %v253
        %v255 = vrot.slane %v254, 1
        %v256 = vadd.f32 %v254, %v255
        %v257 = vsel %vm241, %v239, 0.0
        %v258 = vrot.slane %v257, 4
        %v259 = vadd.f32 %v257, %v258
        %v260 = vrot.slane %v259, 2
        %v261 = vadd.f32 %v259, %v260
        %v262 = vrot.slane %v261, 1
        %v263 = vadd.f32 %v261, %v262
        %v264 = vmul.f32 %v226, %v233
        %vm265 = vcmp.eq.s32.totalorder %v235, 1
        %v266 = vsel %vm265, 1, 0
        %v267 = vcvt.s32.f32 %v266
        %v268 = vmul.f32 %v264, %v267
        %v269 = vsel %vm241, %v268, 0.0
        %v270 = vrot.slane %v269, 4
        %v271 = vadd.f32 %v269, %v270
        %v272 = vrot.slane %v271, 2
        %v273 = vadd.f32 %v271, %v272
        %v274 = vrot.slane %v273, 1
        %v275 = vadd.f32 %v273, %v274
        %v276 = vmul.f32 %v264, %v264
        %v277 = vsel %vm241, %v276, 0.0
        %v278 = vrot.slane %v277, 4
        %v279 = vadd.f32 %v277, %v278
        %v280 = vrot.slane %v279, 2
        %v281 = vadd.f32 %v279, %v280
        %v282 = vrot.slane %v281, 1
        %v283 = vadd.f32 %v281, %v282
        %v284 = vsel %vm241, %v267, 0.0
        %v285 = vrot.slane %v284, 4
        %v286 = vadd.f32 %v284, %v285
        %v287 = vrot.slane %v286, 2
        %v288 = vadd.f32 %v286, %v287
        %v289 = vrot.slane %v288, 1
        %v290 = vadd.f32 %v288, %v289
        %v291 = vmul.f32 %v229, %v233
        %vm292 = vcmp.eq.s32.totalorder %v235, 2
        %v293 = vsel %vm292, 1, 0
        %v294 = vcvt.s32.f32 %v293
        %v295 = vmul.f32 %v291, %v294
        %v296 = vsel %vm241, %v295, 0.0
        %v297 = vrot.slane %v296, 4
        %v298 = vadd.f32 %v296, %v297
        %v299 = vrot.slane %v298, 2
        %v300 = vadd.f32 %v298, %v299
        %v301 = vrot.slane %v300, 1
        %v302 = vadd.f32 %v300, %v301
        %v303 = vmul.f32 %v291, %v291
        %v304 = vsel %vm241, %v303, 0.0
        %v305 = vrot.slane %v304, 4
        %v306 = vadd.f32 %v304, %v305
        %v307 = vrot.slane %v306, 2
        %v308 = vadd.f32 %v306, %v307
        %v309 = vrot.slane %v308, 1
        %v310 = vadd.f32 %v308, %v309
        %v311 = vsel %vm241, %v294, 0.0
        %v312 = vrot.slane %v311, 4
        %v313 = vadd.f32 %v311, %v312
        %v314 = vrot.slane %v313, 2
        %v315 = vadd.f32 %v313, %v314
        %v316 = vrot.slane %v315, 1
        %v317 = vadd.f32 %v315, %v316
        %vm318 = vcmask 1040384
        %v319 = vsel %vm318, %v248, %v256
        %v320 = vsel %vm241, %v319, %v263
        %vm321 = vcmask 1042432
        %v322 = vsel %vm321, %v320, %v275
        %vm323 = vcmask 1043456
        %v324 = vsel %vm323, %v322, %v283
        %vm325 = vcmask 1044480
        %v326 = vsel %vm325, %v324, %v290
        %vm327 = vcmask 1045504
        %v328 = vsel %vm327, %v326, %v302
        %vm329 = vcmask 1046528
        %v330 = vsel %vm329, %v328, %v310
        %331 = vst [vmem:[%s213] sm:$0xff] %v330
        %332 = vst [vmem:[%s213 + $0x8] sm:$0x1] %v317
        %p333 = scmp.lt.s32.totalorder %s20, 1
        %s334 = scalar_select %p333, %s20, 1
        %p335 = scmp.lt.s32.totalorder %s21, 0
        %s336 = scalar_select %p335, %s21, 0
        %s337 = smul.addr %s336, 2
        %s338 = smul.addr %s334, 2
        %s339 = sadd.s32 %s337, %s338
        %s340 = smul.addr %s339, 8
        %s341 = scalar_lea.vmem %s2, %s340
        // Predicated region
        $region33: #{tpu_custom_call.1} parent=27 // pred_check
          %p342 = pneg %p104
        $region34: #{tpu_custom_call.1} parent=27 // pred_check_branch
          %344 = sbr.rel (%p342) target = $region36
        $region35: #{tpu_custom_call.1} parent=27 // pred_region
          _
        $region36: #{tpu_custom_call.1} parent=27 // pred_fallthru
          _
      $region28: #{tpu_custom_call.1} parent=5 // pred_fallthru
        _
      %p345 = scmp.le.s32.totalorder 2, %s11
      // Predicated region
      $region37: #{tpu_custom_call.1} parent=5 // pred_check
        %p346 = pneg %p345
      $region38: #{tpu_custom_call.1} parent=5 // pred_check_branch
        %348 = sbr.rel (%p346) target = $region40
      $region39: #{tpu_custom_call.1} parent=5 // pred_region
        %s349 = ssub.s32 %s11, 2
        // Predicated region
        $region41: #{tpu_custom_call.1} parent=39 // pred_check
          %p350 = pneg %p110
        $region42: #{tpu_custom_call.1} parent=39 // pred_check_branch
          %352 = sbr.rel (%p350) target = $region44
        $region43: #{tpu_custom_call.1} parent=39 // pred_region
          %p353 = scmp.lt.s32.totalorder %s22, 1
          %s354 = scalar_select %p353, %s22, 1
          %p355 = scmp.lt.s32.totalorder %s23, 0
          %s356 = scalar_select %p355, %s23, 0
          %s357 = smul.addr %s356, 2
          %s358 = smul.addr %s354, 2
          %s359 = sadd.s32 %s357, %s358
          %s360 = smul.addr %s359, 8
          %s361 = scalar_lea.vmem %s2, %s360
        $region44: #{tpu_custom_call.1} parent=39 // pred_fallthru
          _
      $region40: #{tpu_custom_call.1} parent=5 // pred_fallthru
        _
    $region6: #{tpu_custom_call.1} parent=1 // loop_footer
      %s15 = sadd.s32 1, %s11
    $region7: #{tpu_custom_call.1} parent=1 // loop_footer_branch
      %10 = sbr.rel target = $region3
    $region8: #{tpu_custom_call.1} parent=1 // loop_exit
      _
    %362 = vsyncpa [#allocation3], 1
    %s363 = scalar_lea.sflag [#allocation3], 1
    %364 = vsyncpa %s363, 1

</llo_original>
